<compile_context>
chip_gen: v7x
topology: tpu7x:2x2x1
jax: 0.10.0
libtpu: 0.0.40
codegen_flags: <defaults>
</compile_context>

<pallas_src>
import functools

import jax
import jax.numpy as jnp
from jax import lax
from jax.experimental import pallas as pl
from jax.experimental.pallas import tpu as pltpu

EPS = 1e-5
_LANE = 128
_SUBLANE = 8
_TILE_TARGET_BYTES = 2 * 1024 * 1024     # ~2 MiB row tiles for the pipelined path
_FAST_PATH_F32_BYTES = 2 * 1024 * 1024   # single-block path if the f32 copy fits here
_VMEM_LIMIT_BYTES = 32 * 1024 * 1024


def _round_up(a, b):
    return (a + b - 1) // b * b


def _fold_groups(v, fold_c, cp):
    """Fold per-lane partial sums across the k = cp // fold_c packed groups.

    v: (1, cp).  Returns (1, cp) where lane j holds the total for channel
    j % fold_c, already replicated in the packed layout (no reshape needed).
    Uses log2(k) lane rotations (XLU slot, essentially free).  No-op if
    fold_c == cp (no packing).
    """
    if fold_c == cp:
        return v
    out = v
    shift = fold_c
    while shift < cp:
        out = out + pltpu.roll(out, shift=shift, axis=1)
        shift *= 2
    return out


def _finalize_scale_shift(s, ss, gamma, beta, *, inv_m, fold_c, cp):
    s = _fold_groups(s, fold_c, cp)
    ss = _fold_groups(ss, fold_c, cp)
    mean = s * inv_m
    # NOTE: var = E[x^2] - mean^2 accumulated in f32.  Fine for activation-scale
    # data; for inputs with |mean| >> std a shifted/Welford accumulation would
    # be preferable.
    var = jnp.maximum(ss * inv_m - mean * mean, 0.0)
    inv_std = lax.rsqrt(var + EPS)
    scale = gamma * inv_std
    shift = beta - mean * scale
    return scale, shift


def _stats_kernel(x_ref, gamma_ref, beta_ref, scale_ref, shift_ref,
                  sum_ref, sumsq_ref, *, inv_m, fold_c, cp):
    """Sweep 1: accumulate per-lane sum / sum-of-squares; finalize scale/shift."""
    i = pl.program_id(0)

    @pl.when(i == 0)
    def _():
        sum_ref[...] = jnp.zeros_like(sum_ref)
        sumsq_ref[...] = jnp.zeros_like(sumsq_ref)
        scale_ref[...] = jnp.zeros_like(scale_ref)
        shift_ref[...] = jnp.zeros_like(shift_ref)

    x = x_ref[...].astype(jnp.float32)
    sum_ref[...] += jnp.sum(x, axis=0, keepdims=True)
    sumsq_ref[...] += jnp.sum(x * x, axis=0, keepdims=True)

    @pl.when(i == pl.num_programs(0) - 1)
    def _():
        scale, shift = _finalize_scale_shift(
            sum_ref[...], sumsq_ref[...], gamma_ref[...], beta_ref[...],
            inv_m=inv_m, fold_c=fold_c, cp=cp)
        scale_ref[...] = scale
        shift_ref[...] = shift


def _apply_kernel(x_ref, scale_ref, shift_ref, o_ref):
    """Sweep 2: y = x * scale + shift (2 VALU ops per element)."""
    x = x_ref[...].astype(jnp.float32)
    o_ref[...] = (x * scale_ref[...] + shift_ref[...]).astype(o_ref.dtype)


def _fused_kernel(x_ref, gamma_ref, beta_ref, o_ref, *, inv_m, fold_c, cp):
    """Small-input fast path: stats + apply on one resident block (1 HBM read)."""
    x = x_ref[...].astype(jnp.float32)
    s = jnp.sum(x, axis=0, keepdims=True)
    ss = jnp.sum(x * x, axis=0, keepdims=True)
    scale, shift = _finalize_scale_shift(
        s, ss, gamma_ref[...], beta_ref[...], inv_m=inv_m, fold_c=fold_c, cp=cp)
    o_ref[...] = (x * scale + shift).astype(o_ref.dtype)


@jax.jit
def ltr_batch_norm(x, gamma, beta):
    """LTRBatchNorm forward.  x: (N, L, C) or (N, C) channels-last; gamma/beta: (C,)."""
    orig_shape = x.shape
    if x.ndim == 3:
        n, l, c = x.shape
        m = n * l
    elif x.ndim == 2:
        m, c = x.shape
    else:
        raise ValueError("LTRBatchNorm expects 2D or 3D input")
    x2d = x.reshape(m, c)

    # ---- lane-dense layout: pack small C into 128 lanes, or pad C up to 128k.
    if c % _LANE == 0:
        k = 1
        cp = c
        xp = x2d
        r = m
        g_p = gamma.astype(jnp.float32)
        b_p = beta.astype(jnp.float32)
        fold_c = cp
    elif _LANE % c == 0:
        k = _LANE // c          # power of two
        cp = _LANE
        m_pad = _round_up(m, k)
        if m_pad != m:
            x2d = jnp.pad(x2d, ((0, m_pad - m), (0, 0)))
        r = m_pad // k
        xp = x2d.reshape(r, cp)  # pure reshape: row r, lane g*c + ch = x[r*k+g, ch]
        g_p = jnp.tile(gamma.astype(jnp.float32), k)
        b_p = jnp.tile(beta.astype(jnp.float32), k)
        fold_c = c
    else:
        k = 1
        cp = _round_up(c, _LANE)
        xp = jnp.pad(x2d, ((0, 0), (0, cp - c)))
        r = m
        g_p = jnp.pad(gamma.astype(jnp.float32), (0, cp - c))
        b_p = jnp.pad(beta.astype(jnp.float32), (0, cp - c))
        fold_c = cp

    g_p = g_p.reshape(1, cp)
    b_p = b_p.reshape(1, cp)
    inv_m = 1.0 / float(m)   # true element count per channel (zero padding adds 0)
    itemsize = jnp.dtype(x.dtype).itemsize

    if r * cp * 4 <= _FAST_PATH_F32_BYTES:
        # ---------- fast path: single resident full-extent block ----------
        out_p = pl.pallas_call(
            functools.partial(_fused_kernel, inv_m=inv_m, fold_c=fold_c, cp=cp),
            out_shape=jax.ShapeDtypeStruct((r, cp), x.dtype),
            grid_spec=pltpu.PrefetchScalarGridSpec(
                num_scalar_prefetch=0,
                grid=(1,),
                in_specs=[pl.BlockSpec((r, cp), lambda i: (0, 0)),
                          pl.BlockSpec((1, cp), lambda i: (0, 0)),
                          pl.BlockSpec((1, cp), lambda i: (0, 0))],
                out_specs=pl.BlockSpec((r, cp), lambda i: (0, 0)),
            ),
            compiler_params=pltpu.CompilerParams(
                dimension_semantics=("arbitrary",),
                vmem_limit_bytes=_VMEM_LIMIT_BYTES),
        )(xp, g_p, b_p)
    else:
        # ---------- tiled two-sweep path ----------
        tm = _TILE_TARGET_BYTES // (cp * itemsize)
        tm = max(_SUBLANE, (tm // _SUBLANE) * _SUBLANE)
        nt = -(-r // tm)                        # number of row tiles
        tm = _round_up(-(-r // nt), _SUBLANE)   # rebalance to minimize padding
        rp = nt * tm
        if rp != r:
            xp = jnp.pad(xp, ((0, rp - r), (0, 0)))

        # Sweep 1: per-channel statistics -> scale/shift (resident accumulator).
        scale, shift = pl.pallas_call(
            functools.partial(_stats_kernel, inv_m=inv_m, fold_c=fold_c, cp=cp),
            out_shape=(jax.ShapeDtypeStruct((1, cp), jnp.float32),
                       jax.ShapeDtypeStruct((1, cp), jnp.float32)),
            grid_spec=pltpu.PrefetchScalarGridSpec(
                num_scalar_prefetch=0,
                grid=(nt,),
                in_specs=[pl.BlockSpec((tm, cp), lambda i: (i, 0)),
                          pl.BlockSpec((1, cp), lambda i: (0, 0)),
                          pl.BlockSpec((1, cp), lambda i: (0, 0))],
                out_specs=(pl.BlockSpec((1, cp), lambda i: (0, 0)),
                           pl.BlockSpec((1, cp), lambda i: (0, 0))),
                scratch_shapes=[pltpu.VMEM((1, cp), jnp.float32),
                                pltpu.VMEM((1, cp), jnp.float32)],
            ),
            compiler_params=pltpu.CompilerParams(
                dimension_semantics=("arbitrary",),
                vmem_limit_bytes=_VMEM_LIMIT_BYTES),
        )(xp, g_p, b_p)

        # Sweep 2: normalize.  Row-tile axis is "parallel" (v7x megacore).
        out_p = pl.pallas_call(
            _apply_kernel,
            out_shape=jax.ShapeDtypeStruct((rp, cp), x.dtype),
            grid_spec=pltpu.PrefetchScalarGridSpec(
                num_scalar_prefetch=0,
                grid=(nt,),
                in_specs=[pl.BlockSpec((tm, cp), lambda i: (i, 0)),
                          pl.BlockSpec((1, cp), lambda i: (0, 0)),
                          pl.BlockSpec((1, cp), lambda i: (0, 0))],
                out_specs=pl.BlockSpec((tm, cp), lambda i: (i, 0)),
            ),
            compiler_params=pltpu.CompilerParams(
                dimension_semantics=("parallel",),
                vmem_limit_bytes=_VMEM_LIMIT_BYTES),
        )(xp, scale, shift)
        out_p = out_p[:r]

    # ---- undo packing / padding.
    if k > 1:
        out2d = out_p.reshape(r * k, c)[:m]
    else:
        out2d = out_p[:, :c]
    return out2d.reshape(orig_shape)


def _reference(x, gamma, beta):
    """Pure-JAX reference of nn.BatchNorm1d(..., track_running_stats=False)."""
    axes = (0, 1) if x.ndim == 3 else (0,)
    xf = x.astype(jnp.float32)
    mean = jnp.mean(xf, axis=axes, keepdims=True)
    var = jnp.mean((xf - mean) ** 2, axis=axes, keepdims=True)  # biased
    xhat = (xf - mean) / jnp.sqrt(var + EPS)
    return (xhat * gamma + beta).astype(x.dtype)


if __name__ == "__main__":
    key = jax.random.PRNGKey(0)
    keys = jax.random.split(key, 12)

    def make_params(c, k1, k2):
        gamma = 1.0 + 0.05 * jax.random.normal(k1, (c,), jnp.float32)
        beta = 0.05 * jax.random.normal(k2, (c,), jnp.float32)
        return gamma, beta

    def check(x, gamma, beta, name, tol=5e-4):
        y = ltr_batch_norm(x, gamma, beta)
        jax.block_until_ready(y)
        assert y.shape == x.shape and y.dtype == x.dtype, name
        ref = _reference(x, gamma, beta)
        err = float(jnp.max(jnp.abs(y.astype(jnp.float32) - ref.astype(jnp.float32))))
        assert err < tol, f"{name}: max abs err {err}"

    # 1) small 3D, C=32 (lane-packed fast path) -- matches the module's (N, L, C).
    g32, b32 = make_params(32, keys[0], keys[1])
    x = jax.random.normal(keys[2], (2, 8, 32), jnp.float32)
    check(x, g32, b32, "3d_small")

    # 2) small 2D with row count not a multiple of the packing factor.
    x = jax.random.normal(keys[3], (5, 32), jnp.float32)
    check(x, g32, b32, "2d_small")

    # 3) channel count needing lane padding (C=20).
    g20, b20 = make_params(20, keys[4], keys[5])
    x = jax.random.normal(keys[6], (6, 20), jnp.float32)
    check(x, g20, b20, "2d_pad_c")

    # 4) channel count already lane-dense (C=256).
    g256, b256 = make_params(256, keys[7], keys[8])
    x = jax.random.normal(keys[9], (3, 256), jnp.float32)
    check(x, g256, b256, "2d_c256")

    # 5) larger 3D input -> exercises the two-sweep tiled/pipelined path.
    x = jax.random.normal(keys[10], (32, 1024, 32), jnp.float32) * 2.0 + 0.5
    check(x, g32, b32, "3d_tiled")

    print("KERNEL_OK")
</pallas_src>

<mosaic_0001>
module attributes {stable_mosaic.version = 11 : i64} {
  func.func @_fused_kernel(%arg0: i32, %arg1: memref<4x128xf32, #tpu.memory_space<vmem>>, %arg2: memref<1x128xf32, #tpu.memory_space<vmem>>, %arg3: memref<1x128xf32, #tpu.memory_space<vmem>>, %arg4: memref<4x128xf32, #tpu.memory_space<vmem>>) attributes {dimension_semantics = [#tpu.dimension_semantics<arbitrary>], iteration_bounds = array<i64: 1>, scalar_prefetch = 0 : i64, scratch_operands = 0 : i64, tpu.core_type = #tpu.core_type<tc>, window_params = [{pipeline_mode = #tpu.pipeline_mode<synchronous>, transform_indices = @transform_0, window_bounds = array<i64: 4, 128>}, {pipeline_mode = #tpu.pipeline_mode<synchronous>, transform_indices = @transform_1, window_bounds = array<i64: 1, 128>}, {pipeline_mode = #tpu.pipeline_mode<synchronous>, transform_indices = @transform_2, window_bounds = array<i64: 1, 128>}, {pipeline_mode = #tpu.pipeline_mode<synchronous>, transform_indices = @transform_3, window_bounds = array<i64: 4, 128>}]} {
    %c0 = arith.constant 0 : index
    %c0_0 = arith.constant 0 : index
    %0 = vector.load %arg1[%c0, %c0_0] : memref<4x128xf32, #tpu.memory_space<vmem>>, vector<4x128xf32>
    %cst = arith.constant dense<0.000000e+00> : vector<128xf32>
    %1 = vector.multi_reduction <add>, %0, %cst [0] : vector<4x128xf32> to vector<128xf32>
    %2 = vector.shape_cast %1 : vector<128xf32> to vector<1x128xf32>
    %3 = arith.mulf %0, %0 : vector<4x128xf32>
    %cst_1 = arith.constant dense<0.000000e+00> : vector<128xf32>
    %4 = vector.multi_reduction <add>, %3, %cst_1 [0] : vector<4x128xf32> to vector<128xf32>
    %5 = vector.shape_cast %4 : vector<128xf32> to vector<1x128xf32>
    %c0_2 = arith.constant 0 : index
    %c0_3 = arith.constant 0 : index
    %6 = vector.load %arg2[%c0_2, %c0_3] : memref<1x128xf32, #tpu.memory_space<vmem>>, vector<1x128xf32>
    %c0_4 = arith.constant 0 : index
    %c0_5 = arith.constant 0 : index
    %7 = vector.load %arg3[%c0_4, %c0_5] : memref<1x128xf32, #tpu.memory_space<vmem>>, vector<1x128xf32>
    %c32_i32 = arith.constant 32 : i32
    %8 = tpu.dynamic_rotate %2 by %c32_i32 dim 1 : vector<1x128xf32>, i32 -> vector<1x128xf32>
    %9 = arith.addf %2, %8 : vector<1x128xf32>
    %c64_i32 = arith.constant 64 : i32
    %10 = tpu.dynamic_rotate %9 by %c64_i32 dim 1 : vector<1x128xf32>, i32 -> vector<1x128xf32>
    %11 = arith.addf %9, %10 : vector<1x128xf32>
    %c32_i32_6 = arith.constant 32 : i32
    %12 = tpu.dynamic_rotate %5 by %c32_i32_6 dim 1 : vector<1x128xf32>, i32 -> vector<1x128xf32>
    %13 = arith.addf %5, %12 : vector<1x128xf32>
    %c64_i32_7 = arith.constant 64 : i32
    %14 = tpu.dynamic_rotate %13 by %c64_i32_7 dim 1 : vector<1x128xf32>, i32 -> vector<1x128xf32>
    %15 = arith.addf %13, %14 : vector<1x128xf32>
    %cst_8 = arith.constant 6.250000e-02 : f32
    %16 = vector.broadcast %cst_8 : f32 to vector<1x128xf32>
    %17 = arith.mulf %11, %16 : vector<1x128xf32>
    %cst_9 = arith.constant 6.250000e-02 : f32
    %18 = vector.broadcast %cst_9 : f32 to vector<1x128xf32>
    %19 = arith.mulf %15, %18 : vector<1x128xf32>
    %20 = arith.mulf %17, %17 : vector<1x128xf32>
    %21 = arith.subf %19, %20 : vector<1x128xf32>
    %cst_10 = arith.constant 0.000000e+00 : f32
    %22 = vector.broadcast %cst_10 : f32 to vector<1x128xf32>
    %23 = arith.maximumf %21, %22 : vector<1x128xf32>
    %cst_11 = arith.constant 9.99999974E-6 : f32
    %24 = vector.broadcast %cst_11 : f32 to vector<1x128xf32>
    %25 = arith.addf %23, %24 : vector<1x128xf32>
    %26 = math.rsqrt %25 : vector<1x128xf32>
    %27 = arith.mulf %6, %26 : vector<1x128xf32>
    %28 = arith.mulf %17, %27 : vector<1x128xf32>
    %29 = arith.subf %7, %28 : vector<1x128xf32>
    %30 = vector.broadcast %27 : vector<1x128xf32> to vector<4x128xf32>
    %31 = arith.mulf %0, %30 : vector<4x128xf32>
    %32 = vector.broadcast %29 : vector<1x128xf32> to vector<4x128xf32>
    %33 = arith.addf %31, %32 : vector<4x128xf32>
    %c0_12 = arith.constant 0 : index
    %c0_13 = arith.constant 0 : index
    %34 = vector.load %arg4[%c0_12, %c0_13] : memref<4x128xf32, #tpu.memory_space<vmem>>, vector<4x128xf32>
    tpu.vector_store %arg4[%c0_12, %c0_13], %33 {strides = array<i32>} : memref<4x128xf32, #tpu.memory_space<vmem>>, vector<4x128xf32>,
    return
  }
  func.func @transform_0(%arg0: i32) -> (i32, i32) {
    %c0_i32 = arith.constant 0 : i32
    %c0_i32_0 = arith.constant 0 : i32
    %c0_i32_1 = arith.constant 0 : i32
    return %c0_i32, %c0_i32_0 : i32, i32
  }
  func.func @transform_1(%arg0: i32) -> (i32, i32) {
    %c0_i32 = arith.constant 0 : i32
    %c0_i32_0 = arith.constant 0 : i32
    %c0_i32_1 = arith.constant 0 : i32
    return %c0_i32, %c0_i32_0 : i32, i32
  }
  func.func @transform_2(%arg0: i32) -> (i32, i32) {
    %c0_i32 = arith.constant 0 : i32
    %c0_i32_0 = arith.constant 0 : i32
    %c0_i32_1 = arith.constant 0 : i32
    return %c0_i32, %c0_i32_0 : i32, i32
  }
  func.func @transform_3(%arg0: i32) -> (i32, i32) {
    %c0_i32 = arith.constant 0 : i32
    %c0_i32_0 = arith.constant 0 : i32
    %c0_i32_1 = arith.constant 0 : i32
    return %c0_i32, %c0_i32_0 : i32, i32
  }
}

</mosaic_0001>

<llo_original>
// kernel: tile.13
$region0: #{tile.13}
  #allocation0 [shape = 's32[1]{0}', space=sflag, size = 0x4, scoped, tag = 'scoped memory for tile.13']
  %s0 = inlined_call_operand.vmem [shape: f32[32], index: 0, kind: input, shape index: {}]
  %s1 = inlined_call_operand.vmem [shape: f32[4,32], index: 1, kind: output, shape index: {}]
  // Predicated region
  $region2: #{tile.13} parent=0 // pred_check
    _
  $region3: #{tile.13} parent=0 // pred_check_branch
    %3 = sbr.rel (0) target = $region5
  $region4: #{tile.13} parent=0 // pred_region
    _
  $region5: #{tile.13} parent=0 // pred_fallthru
    _
  %v4 = vld [vmem:[%s0] ss:$0 sm:$0xff]
  %5 = vst [vmem:[%s1] sm:$0xf] %v4

// kernel: tile.18
$region0: #{tile.18}
  %s0 = inlined_call_operand.vmem [shape: f32[4,32], index: 0, kind: input, shape index: {}]
  %s1 = inlined_call_operand.vmem [shape: f32[1,128], index: 1, kind: output, shape index: {}]
  $region1: #{tile.18} parent=0
    #allocation0 [shape = 'u8[4096]{0}', space=vmem, size = 0x1000, scoped, tag = 'scoped mem for output reshape']
    #allocation1 [shape = 'u8[4096]{0}', space=vmem, size = 0x1000, scoped, tag = 'scoped mem for input reshape']
    %s3 = sshllo.u32 0, 4
    %v4 = vld [vmem:[%s0] sm:%s3]
    %5 = vst [vmem:[#allocation1] sm:%s3] %v4
    %v6 = vld [vmem:[#allocation1] sm:$0x1]
    %vm7 = vcmask 261120
    %8 = vst.msk [vmem:[#allocation0] sm:$0x1] %vm7, %v6
    %s9 = scalar_lea.vmem [#allocation1], 3
    %v10 = vld [vmem:[%s9] sm:$0x1]
    %11 = vrot.lane.b32.xlu0 %v10, 96
    %v12 = vpop.permute.xlu0 %11
    %vm13 = vcmask 1048320
    %14 = vst.msk [vmem:[#allocation0] sm:$0x1] %vm13, %v12
    %s15 = scalar_lea.vmem [#allocation1], 2
    %v16 = vld [vmem:[%s15] sm:$0x1]
    %17 = vrot.lane.b32.xlu0 %v16, 64
    %v18 = vpop.permute.xlu0 %17
    %vm19 = vcmask 785920
    %20 = vst.msk [vmem:[#allocation0] sm:$0x1] %vm19, %v18
    %s21 = scalar_lea.vmem [#allocation1], 1
    %v22 = vld [vmem:[%s21] sm:$0x1]
    %23 = vrot.lane.b32.xlu0 %v22, 32
    %v24 = vpop.permute.xlu0 %23
    %vm25 = vcmask 523520
    %26 = vst.msk [vmem:[#allocation0] sm:$0x1] %vm25, %v24
    %s28 = sshllo.u32 0, 1
    %v30 = vld [vmem:[#allocation0] sm:%s28]
    %s31 = sshllo.u32 0, 1
    %32 = vst [vmem:[%s1] sm:%s31] %v30

// kernel: ltr_batch_norm.1
$region0: #{ltr_batch_norm.1}
  #allocation0 [shape = 'u32[]', space=smem, size = 0x4, offset = 0x4, fixed_abs, tag = 'smem constant byte address 0x4 - core index']
  #allocation1 [shape = 'u32[144,128]{1,0:T(1,128)}', space=vmem, size = 0x12000, scoped, tag = 'internal scratch']
  %s0 = inlined_call_operand.vmem [shape: f32[4,128], index: 0, kind: input, shape index: {}]
  %s1 = inlined_call_operand.vmem [shape: f32[1,128], index: 1, kind: input, shape index: {}]
  %s2 = inlined_call_operand.vmem [shape: f32[1,128], index: 2, kind: input, shape index: {}]
  %s3 = inlined_call_operand.vmem [shape: f32[4,128], index: 3, kind: output, shape index: {}]
  %s4 = sld [smem:[#allocation0]]
  $region22: #{ltr_batch_norm.1} parent=0
    _
  %s6 = ssub.s32 1, %s4
  %s7 = scalar_select 0, %s6, %s4
  // Predicated region
  $region2: #{ltr_batch_norm.1} parent=0 // pred_check
    _
  $region3: #{ltr_batch_norm.1} parent=0 // pred_check_branch
    %9 = sbr.rel (0) target = $region5
  $region4: #{ltr_batch_norm.1} parent=0 // pred_region
    _
  $region5: #{ltr_batch_norm.1} parent=0 // pred_fallthru
    _
  // Predicated region
  $region6: #{ltr_batch_norm.1} parent=0 // pred_check
    _
  $region7: #{ltr_batch_norm.1} parent=0 // pred_check_branch
    %11 = sbr.rel (0) target = $region9
  $region8: #{ltr_batch_norm.1} parent=0 // pred_region
    _
  $region9: #{ltr_batch_norm.1} parent=0 // pred_fallthru
    _
  // Predicated region
  $region10: #{ltr_batch_norm.1} parent=0 // pred_check
    _
  $region11: #{ltr_batch_norm.1} parent=0 // pred_check_branch
    %13 = sbr.rel (0) target = $region13
  $region12: #{ltr_batch_norm.1} parent=0 // pred_region
    _
  $region13: #{ltr_batch_norm.1} parent=0 // pred_fallthru
    _
  %v14 = vld [vmem:[%s0] sm:$0xf]
  %vm15 = vcmask 1043456
  %v16 = vsel %vm15, %v14, 0.0
  %v17 = vrot.slane %v16, 4
  %v18 = vadd.f32 %v16, %v17
  %v19 = vrot.slane %v18, 2
  %v20 = vadd.f32 %v18, %v19
  %v21 = vrot.slane %v20, 1
  %v22 = vadd.f32 %v20, %v21
  %v23 = vmul.f32 %v14, %v14
  %v24 = vsel %vm15, %v23, 0.0
  %v25 = vrot.slane %v24, 4
  %v26 = vadd.f32 %v24, %v25
  %v27 = vrot.slane %v26, 2
  %v28 = vadd.f32 %v26, %v27
  %v29 = vrot.slane %v28, 1
  %v30 = vadd.f32 %v28, %v29
  %v31 = vld [vmem:[%s1] sm:$0x1]
  %v32 = vld [vmem:[%s2] sm:$0x1]
  %33 = vrot.lane.b32.xlu0 %v22, 32
  %v34 = vpop.permute.xlu0 %33
  %v35 = vadd.f32 %v22, %v34
  %36 = vrot.lane.b32.xlu0 %v35, 64
  %v37 = vpop.permute.xlu0 %36
  %v38 = vadd.f32 %v35, %v37
  %39 = vrot.lane.b32.xlu0 %v30, 32
  %v40 = vpop.permute.xlu0 %39
  %v41 = vadd.f32 %v30, %v40
  %42 = vrot.lane.b32.xlu0 %v41, 64
  %v43 = vpop.permute.xlu0 %42
  %v44 = vadd.f32 %v41, %v43
  %v45 = vmul.f32 %v38, 0.0625
  %v46 = vmul.f32 %v44, 0.0625
  %v47 = vmul.f32 %v45, %v45
  %v48 = vsub.f32 %v46, %v47
  %v49 = vmax.f32 %v48, 0.0
  %v50 = vadd.f32 %v49, 1e-05
  %v51 = vrsqrt.pop %v50
  %v52 = vmul.f32 %v31, %v51
  %v53 = vmul.f32 %v45, %v52
  %v54 = vsub.f32 %v32, %v53
  %v56 = vlaneseq
  %v57 = vshrl.u32 %v56, 7
  %v58 = vsub.s32 0, %v57
  %v59 = vrot.slane %v52, %v58
  %v61 = vmul.f32 %v14, %v59
  %v63 = vlaneseq
  %v64 = vshrl.u32 %v63, 7
  %v65 = vsub.s32 0, %v64
  %v66 = vrot.slane %v54, %v65
  %v68 = vadd.f32 %v61, %v66
  %69 = vst [vmem:[%s3] sm:$0xf] %v68
  // Predicated region
  $region14: #{ltr_batch_norm.1} parent=0 // pred_check
    _
  $region15: #{ltr_batch_norm.1} parent=0 // pred_check_branch
    %71 = sbr.rel (0) target = $region17
  $region16: #{ltr_batch_norm.1} parent=0 // pred_region
    _
  $region17: #{ltr_batch_norm.1} parent=0 // pred_fallthru
    _
  // Predicated region
  $region18: #{ltr_batch_norm.1} parent=0 // pred_check
    _
  $region19: #{ltr_batch_norm.1} parent=0 // pred_check_branch
    %73 = sbr.rel (0) target = $region21
  $region20: #{ltr_batch_norm.1} parent=0 // pred_region
    _
  $region21: #{ltr_batch_norm.1} parent=0 // pred_fallthru
    _

</llo_original>
